<compile_context>
chip_gen: v7x
topology: tpu7x:2x2x1
jax: 0.10.0
libtpu: 0.0.40
codegen_flags: <defaults>
</compile_context>

<pallas_src>
import jax
import jax.numpy as jnp
from jax import lax
from jax.experimental import pallas as pl
from jax.experimental.pallas import tpu as pltpu


def _softplus(x):
    # Numerically-stable softplus, matches F.softplus semantics.
    return jnp.logaddexp(x, 0.0)


def actor_beta_kernel(s_ref, w1_ref, b1_ref, w2_ref, b2_ref, wh_ref, bh_ref,
                      out_ref):
    # Lane-major compute: batch on the lane (last) axis, features on sublanes.
    # h1 = tanh(W1 @ s^T + b1): fuse the transpose of the s tile into the
    # contraction (lhs contracts dim 1, rhs contracts dim 1 -> W1 @ s^T).
    h1 = jnp.tanh(
        lax.dot_general(
            w1_ref[...], s_ref[...],
            dimension_numbers=(((1,), (1,)), ((), ())),
            preferred_element_type=jnp.float32,
        ) + b1_ref[...]
    )                                                             # [H, TB]
    h2 = jnp.tanh(
        jnp.dot(w2_ref[...], h1, preferred_element_type=jnp.float32)
        + b2_ref[...]
    )                                                             # [H, TB]
    # Fused alpha/beta head: single matmul, single softplus, single store.
    head = (jnp.dot(wh_ref[...], h2, preferred_element_type=jnp.float32)
            + bh_ref[...])                                        # [2A, TB]
    out_ref[...] = _softplus(head) + 1.0


def _choose_tile(B):
    """Pick the batch tile TB and number of grid steps."""
    if B <= 128:
        # Single full-array tile: block shape == array shape, no (8,128)
        # divisibility constraint, one grid step.
        return B, 1
    # Multi-step grid: TB must be a multiple of 128 (lane-dense, unmasked
    # output stores).  Aim for >=2 steps so v7x shards across both
    # TensorCores; cap the tile at 2048 rows.
    tb = min(2048, 128 * pl.cdiv(pl.cdiv(B, 2), 128))
    return tb, pl.cdiv(B, tb)


@jax.jit
def actor_beta_forward(s, params):
    """Actor_Beta forward pass via a batch-tiled, lane-major Pallas kernel.

    Returns (alpha, beta), each [B, action_dim].
    """
    B, state_dim = s.shape
    H = params["w1"].shape[0]
    A2 = params["wh"].shape[0]      # 2 * action_dim (heads fused at setup)
    A = A2 // 2

    TB, n_steps = _choose_tile(B)

    # s tiled along batch; weights & biases stay VMEM-resident (block index
    # constant across grid steps, so Pallas does not re-fetch them).
    s_spec = pl.BlockSpec((TB, state_dim), lambda i: (i, 0))
    w1_spec = pl.BlockSpec((H, state_dim), lambda i: (0, 0))
    b1_spec = pl.BlockSpec((H, 1), lambda i: (0, 0))
    w2_spec = pl.BlockSpec((H, H), lambda i: (0, 0))
    b2_spec = pl.BlockSpec((H, 1), lambda i: (0, 0))
    wh_spec = pl.BlockSpec((A2, H), lambda i: (0, 0))
    bh_spec = pl.BlockSpec((A2, 1), lambda i: (0, 0))
    # Output is the transposed [2A, B] slab: batch on lanes -> lane-dense.
    out_spec = pl.BlockSpec((A2, TB), lambda i: (0, i))

    out = pl.pallas_call(
        actor_beta_kernel,
        out_shape=jax.ShapeDtypeStruct((A2, B), jnp.float32),
        grid_spec=pltpu.PrefetchScalarGridSpec(
            num_scalar_prefetch=0,
            grid=(n_steps,),
            in_specs=[s_spec, w1_spec, b1_spec, w2_spec, b2_spec,
                      wh_spec, bh_spec],
            out_specs=out_spec,
        ),
        compiler_params=pltpu.CompilerParams(
            dimension_semantics=("parallel",),
        ),
    )(s, params["w1"], params["b1"], params["w2"], params["b2"],
      params["wh"], params["bh"])

    out_t = out.T                    # [B, 2A] (tiny copy)
    alpha = out_t[:, :A]
    beta = out_t[:, A:]
    return alpha, beta


def orthogonal(key, shape, gain=1.0, dtype=jnp.float32):
    """Deterministic orthogonal init (mirrors nn.init.orthogonal_)."""
    init = jax.nn.initializers.orthogonal(scale=gain)
    return init(key, shape, dtype)


def make_params(key, state_dim, hidden_width, action_dim):
    """Parameters in PyTorch [out_features, in_features] layout.

    The alpha/beta heads are fused once here (wh = [wa; wb], bh = [ba; bb]),
    so the forward path does a single head matmul and no per-call concats.
    """
    k1, k2, k3, k4 = jax.random.split(key, 4)
    wa = orthogonal(k3, (action_dim, hidden_width), gain=0.01)
    wb = orthogonal(k4, (action_dim, hidden_width), gain=0.01)
    params = {
        "w1": orthogonal(k1, (hidden_width, state_dim), gain=1.0),
        "b1": jnp.zeros((hidden_width, 1), jnp.float32),
        "w2": orthogonal(k2, (hidden_width, hidden_width), gain=1.0),
        "b2": jnp.zeros((hidden_width, 1), jnp.float32),
        "wh": jnp.concatenate([wa, wb], axis=0),          # [2A, H]
        "bh": jnp.zeros((2 * action_dim, 1), jnp.float32),  # [2A, 1]
    }
    return params


def reference_forward(s, p):
    """Pure-JAX reference matching the PyTorch module."""
    A = p["wh"].shape[0] // 2
    h1 = jnp.tanh(s @ p["w1"].T + p["b1"].T)
    h2 = jnp.tanh(h1 @ p["w2"].T + p["b2"].T)
    head = h2 @ p["wh"].T + p["bh"].T
    alpha = jax.nn.softplus(head[:, :A]) + 1.0
    beta = jax.nn.softplus(head[:, A:]) + 1.0
    return alpha, beta


if __name__ == "__main__":
    # Small, forward-consistent shapes.
    batch = 8
    state_dim = 16
    hidden_width = 32
    action_dim = 4

    key = jax.random.PRNGKey(0)
    k_params, k_state = jax.random.split(key)

    params = make_params(k_params, state_dim, hidden_width, action_dim)
    s = jax.random.normal(k_state, (batch, state_dim), dtype=jnp.float32)

    alpha, beta = actor_beta_forward(s, params)
    jax.block_until_ready((alpha, beta))

    # Correctness check against a pure-JAX reference.
    alpha_ref, beta_ref = reference_forward(s, params)
    assert alpha.shape == (batch, action_dim) and beta.shape == (batch, action_dim)
    assert jnp.allclose(alpha, alpha_ref, atol=1e-5, rtol=1e-5)
    assert jnp.allclose(beta, beta_ref, atol=1e-5, rtol=1e-5)
    # Beta-distribution parameters must exceed 1 (softplus(x) + 1 > 1).
    assert bool(jnp.all(alpha > 1.0)) and bool(jnp.all(beta > 1.0))

    # Exercise a non-multiple-of-tile, larger batch: multi-step grid
    # (>=2 steps -> both TCs on v7x) with a partial edge block (no jnp.pad).
    big_batch = 1000
    s_big = jax.random.normal(jax.random.PRNGKey(1), (big_batch, state_dim),
                              dtype=jnp.float32)
    a_big, b_big = actor_beta_forward(s_big, params)
    jax.block_until_ready((a_big, b_big))
    a_big_ref, b_big_ref = reference_forward(s_big, params)
    assert a_big.shape == (big_batch, action_dim)
    assert jnp.allclose(a_big, a_big_ref, atol=1e-5, rtol=1e-5)
    assert jnp.allclose(b_big, b_big_ref, atol=1e-5, rtol=1e-5)

    print("KERNEL_OK")
</pallas_src>

<mosaic_0001>
module attributes {stable_mosaic.version = 11 : i64} {
  func.func @actor_beta_kernel(%arg0: i32, %arg1: memref<8x16xf32, #tpu.memory_space<vmem>>, %arg2: memref<32x16xf32, #tpu.memory_space<vmem>>, %arg3: memref<32x1xf32, #tpu.memory_space<vmem>>, %arg4: memref<32x32xf32, #tpu.memory_space<vmem>>, %arg5: memref<32x1xf32, #tpu.memory_space<vmem>>, %arg6: memref<8x32xf32, #tpu.memory_space<vmem>>, %arg7: memref<8x1xf32, #tpu.memory_space<vmem>>, %arg8: memref<8x8xf32, #tpu.memory_space<vmem>>) attributes {dimension_semantics = [#tpu.dimension_semantics<parallel>], iteration_bounds = array<i64: 1>, scalar_prefetch = 0 : i64, scratch_operands = 0 : i64, tpu.core_type = #tpu.core_type<tc>, window_params = [{transform_indices = @transform_0, window_bounds = array<i64: 8, 16>}, {pipeline_mode = #tpu.pipeline_mode<synchronous>, transform_indices = @transform_1, window_bounds = array<i64: 32, 16>}, {pipeline_mode = #tpu.pipeline_mode<synchronous>, transform_indices = @transform_2, window_bounds = array<i64: 32, 1>}, {pipeline_mode = #tpu.pipeline_mode<synchronous>, transform_indices = @transform_3, window_bounds = array<i64: 32, 32>}, {pipeline_mode = #tpu.pipeline_mode<synchronous>, transform_indices = @transform_4, window_bounds = array<i64: 32, 1>}, {pipeline_mode = #tpu.pipeline_mode<synchronous>, transform_indices = @transform_5, window_bounds = array<i64: 8, 32>}, {pipeline_mode = #tpu.pipeline_mode<synchronous>, transform_indices = @transform_6, window_bounds = array<i64: 8, 1>}, {transform_indices = @transform_7, window_bounds = array<i64: 8, 8>}]} {
    %c0 = arith.constant 0 : index
    %c0_0 = arith.constant 0 : index
    %0 = vector.load %arg2[%c0, %c0_0] : memref<32x16xf32, #tpu.memory_space<vmem>>, vector<32x16xf32>
    %c0_1 = arith.constant 0 : index
    %c0_2 = arith.constant 0 : index
    %1 = vector.load %arg1[%c0_1, %c0_2] : memref<8x16xf32, #tpu.memory_space<vmem>>, vector<8x16xf32>
    %cst = arith.constant dense<0.000000e+00> : vector<32x8xf32>
    %2 = tpu.matmul %0, %1, %cst {dimension_numbers = #tpu.dot_dimension_numbers<[1], [1], [0], [0], [0, 0, 1, 0], [], []>} : vector<32x16xf32>, vector<8x16xf32>, vector<32x8xf32> -> vector<32x8xf32>
    %c0_3 = arith.constant 0 : index
    %c0_4 = arith.constant 0 : index
    %3 = vector.load %arg3[%c0_3, %c0_4] : memref<32x1xf32, #tpu.memory_space<vmem>>, vector<32x1xf32>
    %4 = vector.broadcast %3 : vector<32x1xf32> to vector<32x8xf32>
    %5 = arith.addf %2, %4 : vector<32x8xf32>
    %6 = math.tanh %5 : vector<32x8xf32>
    %c0_5 = arith.constant 0 : index
    %c0_6 = arith.constant 0 : index
    %7 = vector.load %arg4[%c0_5, %c0_6] : memref<32x32xf32, #tpu.memory_space<vmem>>, vector<32x32xf32>
    %cst_7 = arith.constant dense<0.000000e+00> : vector<32x8xf32>
    %8 = tpu.matmul %7, %6, %cst_7 {dimension_numbers = #tpu.dot_dimension_numbers<[1], [0], [0], [1], [0, 0, 1, 1], [], []>} : vector<32x32xf32>, vector<32x8xf32>, vector<32x8xf32> -> vector<32x8xf32>
    %c0_8 = arith.constant 0 : index
    %c0_9 = arith.constant 0 : index
    %9 = vector.load %arg5[%c0_8, %c0_9] : memref<32x1xf32, #tpu.memory_space<vmem>>, vector<32x1xf32>
    %10 = vector.broadcast %9 : vector<32x1xf32> to vector<32x8xf32>
    %11 = arith.addf %8, %10 : vector<32x8xf32>
    %12 = math.tanh %11 : vector<32x8xf32>
    %c0_10 = arith.constant 0 : index
    %c0_11 = arith.constant 0 : index
    %13 = vector.load %arg6[%c0_10, %c0_11] : memref<8x32xf32, #tpu.memory_space<vmem>>, vector<8x32xf32>
    %cst_12 = arith.constant dense<0.000000e+00> : vector<8x8xf32>
    %14 = tpu.matmul %13, %12, %cst_12 {dimension_numbers = #tpu.dot_dimension_numbers<[1], [0], [0], [1], [0, 0, 1, 1], [], []>} : vector<8x32xf32>, vector<32x8xf32>, vector<8x8xf32> -> vector<8x8xf32>
    %c0_13 = arith.constant 0 : index
    %c0_14 = arith.constant 0 : index
    %15 = vector.load %arg7[%c0_13, %c0_14] : memref<8x1xf32, #tpu.memory_space<vmem>>, vector<8x1xf32>
    %16 = vector.broadcast %15 : vector<8x1xf32> to vector<8x8xf32>
    %17 = arith.addf %14, %16 : vector<8x8xf32>
    %cst_15 = arith.constant 0.000000e+00 : f32
    %18 = vector.broadcast %cst_15 : f32 to vector<8x8xf32>
    %19 = arith.maximumf %17, %18 : vector<8x8xf32>
    %20 = vector.broadcast %cst_15 : f32 to vector<8x8xf32>
    %21 = arith.subf %17, %20 : vector<8x8xf32>
    %22 = arith.cmpf one, %21, %21 : vector<8x8xf32>
    %23 = vector.broadcast %cst_15 : f32 to vector<8x8xf32>
    %24 = arith.addf %17, %23 : vector<8x8xf32>
    %25 = math.absf %21 : vector<8x8xf32>
    %cst_16 = arith.constant 0.000000e+00 : f32
    %26 = vector.broadcast %cst_16 : f32 to vector<8x8xf32>
    %27 = arith.subf %26, %25 : vector<8x8xf32>
    %28 = math.exp %27 : vector<8x8xf32>
    %29 = math.log1p %28 : vector<8x8xf32>
    %30 = arith.addf %19, %29 : vector<8x8xf32>
    %31 = arith.select %22, %24, %30 : vector<8x8xi1>, vector<8x8xf32>
    %cst_17 = arith.constant 1.000000e+00 : f32
    %32 = vector.broadcast %cst_17 : f32 to vector<8x8xf32>
    %33 = arith.addf %31, %32 : vector<8x8xf32>
    %c0_18 = arith.constant 0 : index
    %c0_19 = arith.constant 0 : index
    %34 = vector.load %arg8[%c0_18, %c0_19] : memref<8x8xf32, #tpu.memory_space<vmem>>, vector<8x8xf32>
    tpu.vector_store %arg8[%c0_18, %c0_19], %33 {strides = array<i32>} : memref<8x8xf32, #tpu.memory_space<vmem>>, vector<8x8xf32>,
    return
  }
  func.func @transform_0(%arg0: i32) -> (i32, i32) {
    %c0_i32 = arith.constant 0 : i32
    %c0_i32_0 = arith.constant 0 : i32
    return %arg0, %c0_i32 : i32, i32
  }
  func.func @transform_1(%arg0: i32) -> (i32, i32) {
    %c0_i32 = arith.constant 0 : i32
    %c0_i32_0 = arith.constant 0 : i32
    %c0_i32_1 = arith.constant 0 : i32
    return %c0_i32, %c0_i32_0 : i32, i32
  }
  func.func @transform_2(%arg0: i32) -> (i32, i32) {
    %c0_i32 = arith.constant 0 : i32
    %c0_i32_0 = arith.constant 0 : i32
    %c0_i32_1 = arith.constant 0 : i32
    return %c0_i32, %c0_i32_0 : i32, i32
  }
  func.func @transform_3(%arg0: i32) -> (i32, i32) {
    %c0_i32 = arith.constant 0 : i32
    %c0_i32_0 = arith.constant 0 : i32
    %c0_i32_1 = arith.constant 0 : i32
    return %c0_i32, %c0_i32_0 : i32, i32
  }
  func.func @transform_4(%arg0: i32) -> (i32, i32) {
    %c0_i32 = arith.constant 0 : i32
    %c0_i32_0 = arith.constant 0 : i32
    %c0_i32_1 = arith.constant 0 : i32
    return %c0_i32, %c0_i32_0 : i32, i32
  }
  func.func @transform_5(%arg0: i32) -> (i32, i32) {
    %c0_i32 = arith.constant 0 : i32
    %c0_i32_0 = arith.constant 0 : i32
    %c0_i32_1 = arith.constant 0 : i32
    return %c0_i32, %c0_i32_0 : i32, i32
  }
  func.func @transform_6(%arg0: i32) -> (i32, i32) {
    %c0_i32 = arith.constant 0 : i32
    %c0_i32_0 = arith.constant 0 : i32
    %c0_i32_1 = arith.constant 0 : i32
    return %c0_i32, %c0_i32_0 : i32, i32
  }
  func.func @transform_7(%arg0: i32) -> (i32, i32) {
    %c0_i32 = arith.constant 0 : i32
    %c0_i32_0 = arith.constant 0 : i32
    return %c0_i32, %arg0 : i32, i32
  }
}

</mosaic_0001>

<llo_original>
// kernel: actor_beta_forward.1
$region0: #{actor_beta_forward.1}
  #allocation0 [shape = 'u32[]', space=smem, size = 0x4, offset = 0x4, fixed_abs, tag = 'smem constant byte address 0x4 - core index']
  #allocation1 [shape = 'u32[144,128]{1,0:T(1,128)}', space=vmem, size = 0x12000, scoped, tag = 'internal scratch']
  %s0 = inlined_call_operand.vmem [shape: f32[8,16], index: 0, kind: input, shape index: {}]
  %s1 = inlined_call_operand.vmem [shape: f32[32,16], index: 1, kind: input, shape index: {}]
  %s2 = inlined_call_operand.vmem [shape: f32[32,1], index: 2, kind: input, shape index: {}]
  %s3 = inlined_call_operand.vmem [shape: f32[32,32], index: 3, kind: input, shape index: {}]
  %s4 = inlined_call_operand.vmem [shape: f32[32,1], index: 4, kind: input, shape index: {}]
  %s5 = inlined_call_operand.vmem [shape: f32[8,32], index: 5, kind: input, shape index: {}]
  %s6 = inlined_call_operand.vmem [shape: f32[8,1], index: 6, kind: input, shape index: {}]
  %s7 = inlined_call_operand.vmem [shape: f32[8,8], index: 7, kind: output, shape index: {}]
  %s8 = sld [smem:[#allocation0]]
  $region38: #{actor_beta_forward.1} parent=0
    _
  %s10 = ssub.s32 1, %s8
  %s11 = scalar_select 0, %s10, %s8
  // Predicated region
  $region2: #{actor_beta_forward.1} parent=0 // pred_check
    _
  $region3: #{actor_beta_forward.1} parent=0 // pred_check_branch
    %13 = sbr.rel (0) target = $region5
  $region4: #{actor_beta_forward.1} parent=0 // pred_region
    _
  $region5: #{actor_beta_forward.1} parent=0 // pred_fallthru
    _
  // Predicated region
  $region6: #{actor_beta_forward.1} parent=0 // pred_check
    _
  $region7: #{actor_beta_forward.1} parent=0 // pred_check_branch
    %15 = sbr.rel (0) target = $region9
  $region8: #{actor_beta_forward.1} parent=0 // pred_region
    _
  $region9: #{actor_beta_forward.1} parent=0 // pred_fallthru
    _
  // Predicated region
  $region10: #{actor_beta_forward.1} parent=0 // pred_check
    _
  $region11: #{actor_beta_forward.1} parent=0 // pred_check_branch
    %17 = sbr.rel (0) target = $region13
  $region12: #{actor_beta_forward.1} parent=0 // pred_region
    _
  $region13: #{actor_beta_forward.1} parent=0 // pred_fallthru
    _
  // Predicated region
  $region14: #{actor_beta_forward.1} parent=0 // pred_check
    _
  $region15: #{actor_beta_forward.1} parent=0 // pred_check_branch
    %19 = sbr.rel (0) target = $region17
  $region16: #{actor_beta_forward.1} parent=0 // pred_region
    _
  $region17: #{actor_beta_forward.1} parent=0 // pred_fallthru
    _
  // Predicated region
  $region18: #{actor_beta_forward.1} parent=0 // pred_check
    _
  $region19: #{actor_beta_forward.1} parent=0 // pred_check_branch
    %21 = sbr.rel (0) target = $region21
  $region20: #{actor_beta_forward.1} parent=0 // pred_region
    _
  $region21: #{actor_beta_forward.1} parent=0 // pred_fallthru
    _
  // Predicated region
  $region22: #{actor_beta_forward.1} parent=0 // pred_check
    _
  $region23: #{actor_beta_forward.1} parent=0 // pred_check_branch
    %23 = sbr.rel (0) target = $region25
  $region24: #{actor_beta_forward.1} parent=0 // pred_region
    _
  $region25: #{actor_beta_forward.1} parent=0 // pred_fallthru
    _
  // Predicated region
  $region26: #{actor_beta_forward.1} parent=0 // pred_check
    _
  $region27: #{actor_beta_forward.1} parent=0 // pred_check_branch
    %25 = sbr.rel (0) target = $region29
  $region28: #{actor_beta_forward.1} parent=0 // pred_region
    _
  $region29: #{actor_beta_forward.1} parent=0 // pred_fallthru
    _
  %v26 = vld [vmem:[%s1] sm:$0xff]
  %v27 = vld [vmem:[%s1 + $0x8] sm:$0xff]
  %v28 = vld [vmem:[%s1 + $0x10] sm:$0xff]
  %v29 = vld [vmem:[%s1 + $0x18] sm:$0xff]
  %v30 = vld [vmem:[%s0] sm:$0xff]
  %v31 = vld [vmem:[%s2] sm:$0xff]
  %v32 = vld [vmem:[%s2 + $0x8] sm:$0xff]
  %v33 = vld [vmem:[%s2 + $0x10] sm:$0xff]
  %v34 = vld [vmem:[%s2 + $0x18] sm:$0xff]
  %36 = vset.pattern.permute.xlu0 0
  %37 = vperm.xlu0 %36, %v31
  %v38 = vpop.permute.xlu0 %37
  %41 = vset.pattern.permute.xlu0 0
  %42 = vperm.xlu0 %41, %v32
  %v43 = vpop.permute.xlu0 %42
  %46 = vset.pattern.permute.xlu0 0
  %47 = vperm.xlu0 %46, %v33
  %v48 = vpop.permute.xlu0 %47
  %51 = vset.pattern.permute.xlu0 0
  %52 = vperm.xlu0 %51, %v34
  %v53 = vpop.permute.xlu0 %52
  %vm55 = vcmask 130048
  %v57 = vsel %vm55, %v26, 0
  %v60 = vsel %vm55, %v27, 0
  %v63 = vsel %vm55, %v28, 0
  %v66 = vsel %vm55, %v29, 0
  %v69 = vsel %vm55, %v30, 0
  %71 = vmatprep.subr.mxu0 0.0
  %72 = vmatpush1.xpose.msra.mxu0 %v69
  %73 = vmatprep.subr.mxu0 0.0
  %74 = vmatpush1.xpose.msra.mxu0 0.0
  %75 = vmatprep.subr.mxu0 0.0
  %76 = vmatpush1.xpose.msra.mxu0 0.0
  %77 = vmatprep.subr.mxu0 0.0
  %78 = vmatpush1.xpose.msra.mxu0 0.0
  %79 = vmatprep.subr.mxu0 0.0
  %80 = vmatpush1.xpose.msra.mxu0 0.0
  %81 = vmatprep.subr.mxu0 0.0
  %82 = vmatpush1.xpose.msra.mxu0 0.0
  %83 = vmatprep.subr.mxu0 0.0
  %84 = vmatpush1.xpose.msra.mxu0 0.0
  %85 = vmatprep.subr.mxu0 0.0
  %86 = vmatpush1.xpose.msra.mxu0 0.0
  %87 = vmatprep.subr.mxu0 0.0
  %88 = vmatpush1.xpose.msra.mxu0 0.0
  %89 = vmatprep.subr.mxu0 0.0
  %90 = vmatpush1.xpose.msra.mxu0 0.0
  %91 = vmatprep.subr.mxu0 0.0
  %92 = vmatpush1.xpose.msra.mxu0 0.0
  %93 = vmatprep.subr.mxu0 0.0
  %94 = vmatpush1.xpose.msra.mxu0 0.0
  %95 = vmatprep.subr.mxu0 0.0
  %96 = vmatpush1.xpose.msra.mxu0 0.0
  %97 = vmatprep.subr.mxu0 0.0
  %98 = vmatpush1.xpose.msra.mxu0 0.0
  %99 = vmatprep.subr.mxu0 0.0
  %100 = vmatpush1.xpose.msra.mxu0 0.0
  %101 = vmatprep.subr.mxu0 0.0
  %102 = vmatpush1.xpose.msra.mxu0 0.0
  %103 = vmatprep.subr.mxu0 0.0
  %104 = vmatpush1.xpose.msra.mxu0 0.0
  %105 = vmatprep.subr.mxu0 0.0
  %106 = vmatpush1.xpose.msra.mxu0 0.0
  %107 = vmatprep.subr.mxu0 0.0
  %108 = vmatpush1.xpose.msra.mxu0 0.0
  %109 = vmatprep.subr.mxu0 0.0
  %110 = vmatpush1.xpose.msra.mxu0 0.0
  %111 = vmatprep.subr.mxu0 0.0
  %112 = vmatpush1.xpose.msra.mxu0 0.0
  %113 = vmatprep.subr.mxu0 0.0
  %114 = vmatpush1.xpose.msra.mxu0 0.0
  %115 = vmatprep.subr.mxu0 0.0
  %116 = vmatpush1.xpose.msra.mxu0 0.0
  %117 = vmatprep.subr.mxu0 0.0
  %118 = vmatpush1.xpose.msra.mxu0 0.0
  %119 = vmatprep.subr.mxu0 0.0
  %120 = vmatpush1.xpose.msra.mxu0 0.0
  %121 = vmatprep.subr.mxu0 0.0
  %122 = vmatpush1.xpose.msra.mxu0 0.0
  %123 = vmatprep.subr.mxu0 0.0
  %124 = vmatpush1.xpose.msra.mxu0 0.0
  %125 = vmatprep.subr.mxu0 0.0
  %126 = vmatpush1.xpose.msra.mxu0 0.0
  %127 = vmatprep.subr.mxu0 0.0
  %128 = vmatpush1.xpose.msra.mxu0 0.0
  %129 = vmatprep.subr.mxu0 0.0
  %130 = vmatpush1.xpose.msra.mxu0 0.0
  %131 = vmatprep.subr.mxu0 0.0
  %132 = vmatpush1.xpose.msra.mxu0 0.0
  %133 = vmatprep.subr.mxu0 0.0
  %134 = vmatpush1.xpose.msra.mxu0 0.0
  %135 = vmatprep.mubr.f32.mxu0 0.0
  %136 = vmatmul.mubr.f32.gmra.mrb[0].mxu0 %v57
  %v137 = vpop.f32.mrb[0].mxu0
  %v138 = vadd.f32 %v38, %v137
  %v139 = vpop.f32.mrb[0].mxu0
  %140 = vmatprep.mubr.f32.mxu0 0.0
  %141 = vmatmul.mubr.f32.gmra.mrb[0].mxu0 %v60
  %v142 = vpop.f32.mrb[0].mxu0
  %v143 = vadd.f32 %v43, %v142
  %v144 = vpop.f32.mrb[0].mxu0
  %145 = vmatprep.mubr.f32.mxu0 0.0
  %146 = vmatmul.mubr.f32.gmra.mrb[0].mxu0 %v63
  %v147 = vpop.f32.mrb[0].mxu0
  %v148 = vadd.f32 %v48, %v147
  %v149 = vpop.f32.mrb[0].mxu0
  %150 = vmatprep.mubr.f32.mxu0 0.0
  %151 = vmatmul.mubr.f32.gmra.mrb[0].mxu0 %v66
  %v152 = vpop.f32.mrb[0].mxu0
  %v153 = vadd.f32 %v53, %v152
  %v154 = vpop.f32.mrb[0].mxu0
  %155 = vdwg.mxu0
  %v156 = vtanh.pop %v138
  %v157 = vtanh.pop %v143
  %v158 = vtanh.pop %v148
  %v159 = vtanh.pop %v153
  %v160 = vld [vmem:[%s3] sm:$0xff]
  %v161 = vld [vmem:[%s3 + $0x8] sm:$0xff]
  %v162 = vld [vmem:[%s3 + $0x10] sm:$0xff]
  %v163 = vld [vmem:[%s3 + $0x18] sm:$0xff]
  %v164 = vld [vmem:[%s4] sm:$0xff]
  %v165 = vld [vmem:[%s4 + $0x8] sm:$0xff]
  %v166 = vld [vmem:[%s4 + $0x10] sm:$0xff]
  %v167 = vld [vmem:[%s4 + $0x18] sm:$0xff]
  %169 = vset.pattern.permute.xlu0 0
  %170 = vperm.xlu0 %169, %v164
  %v171 = vpop.permute.xlu0 %170
  %174 = vset.pattern.permute.xlu0 0
  %175 = vperm.xlu0 %174, %v165
  %v176 = vpop.permute.xlu0 %175
  %179 = vset.pattern.permute.xlu0 0
  %180 = vperm.xlu0 %179, %v166
  %v181 = vpop.permute.xlu0 %180
  %184 = vset.pattern.permute.xlu0 0
  %185 = vperm.xlu0 %184, %v167
  %v186 = vpop.permute.xlu0 %185
  %vm188 = vcmask 261120
  %v190 = vsel %vm188, %v160, 0
  %v193 = vsel %vm188, %v161, 0
  %v196 = vsel %vm188, %v162, 0
  %v199 = vsel %vm188, %v163, 0
  %201 = vmatprep.subr.mxu0 0.0
  %202 = vmatpush1.msra.mxu0 %v156
  %203 = vmatprep.subr.mxu0 0.0
  %204 = vmatpush1.msra.mxu0 %v157
  %205 = vmatprep.subr.mxu0 0.0
  %206 = vmatpush1.msra.mxu0 %v158
  %207 = vmatprep.subr.mxu0 0.0
  %208 = vmatpush1.msra.mxu0 %v159
  %209 = vmatprep.subr.mxu0 0.0
  %210 = vmatpush1.msra.mxu0 0.0
  %211 = vmatprep.subr.mxu0 0.0
  %212 = vmatpush1.msra.mxu0 0.0
  %213 = vmatprep.subr.mxu0 0.0
  %214 = vmatpush1.msra.mxu0 0.0
  %215 = vmatprep.subr.mxu0 0.0
  %216 = vmatpush1.msra.mxu0 0.0
  %217 = vmatprep.subr.mxu0 0.0
  %218 = vmatpush1.msra.mxu0 0.0
  %219 = vmatprep.subr.mxu0 0.0
  %220 = vmatpush1.msra.mxu0 0.0
  %221 = vmatprep.subr.mxu0 0.0
  %222 = vmatpush1.msra.mxu0 0.0
  %223 = vmatprep.subr.mxu0 0.0
  %224 = vmatpush1.msra.mxu0 0.0
  %225 = vmatprep.subr.mxu0 0.0
  %226 = vmatpush1.msra.mxu0 0.0
  %227 = vmatprep.subr.mxu0 0.0
  %228 = vmatpush1.msra.mxu0 0.0
  %229 = vmatprep.subr.mxu0 0.0
  %230 = vmatpush1.msra.mxu0 0.0
  %231 = vmatprep.subr.mxu0 0.0
  %232 = vmatpush1.msra.mxu0 0.0
  %233 = vmatprep.subr.mxu0 0.0
  %234 = vmatpush1.msra.mxu0 0.0
  %235 = vmatprep.subr.mxu0 0.0
  %236 = vmatpush1.msra.mxu0 0.0
  %237 = vmatprep.subr.mxu0 0.0
  %238 = vmatpush1.msra.mxu0 0.0
  %239 = vmatprep.subr.mxu0 0.0
  %240 = vmatpush1.msra.mxu0 0.0
  %241 = vmatprep.subr.mxu0 0.0
  %242 = vmatpush1.msra.mxu0 0.0
  %243 = vmatprep.subr.mxu0 0.0
  %244 = vmatpush1.msra.mxu0 0.0
  %245 = vmatprep.subr.mxu0 0.0
  %246 = vmatpush1.msra.mxu0 0.0
  %247 = vmatprep.subr.mxu0 0.0
  %248 = vmatpush1.msra.mxu0 0.0
  %249 = vmatprep.subr.mxu0 0.0
  %250 = vmatpush1.msra.mxu0 0.0
  %251 = vmatprep.subr.mxu0 0.0
  %252 = vmatpush1.msra.mxu0 0.0
  %253 = vmatprep.subr.mxu0 0.0
  %254 = vmatpush1.msra.mxu0 0.0
  %255 = vmatprep.subr.mxu0 0.0
  %256 = vmatpush1.msra.mxu0 0.0
  %257 = vmatprep.subr.mxu0 0.0
  %258 = vmatpush1.msra.mxu0 0.0
  %259 = vmatprep.subr.mxu0 0.0
  %260 = vmatpush1.msra.mxu0 0.0
  %261 = vmatprep.subr.mxu0 0.0
  %262 = vmatpush1.msra.mxu0 0.0
  %263 = vmatprep.subr.mxu0 0.0
  %264 = vmatpush1.msra.mxu0 0.0
  %265 = vmatprep.mubr.f32.mxu0 0.0
  %266 = vmatmul.mubr.f32.gmra.mrb[0].mxu0 %v190
  %v267 = vpop.f32.mrb[0].mxu0
  %v268 = vadd.f32 %v171, %v267
  %v269 = vpop.f32.mrb[0].mxu0
  %270 = vmatprep.mubr.f32.mxu0 0.0
  %271 = vmatmul.mubr.f32.gmra.mrb[0].mxu0 %v193
  %v272 = vpop.f32.mrb[0].mxu0
  %v273 = vadd.f32 %v176, %v272
  %v274 = vpop.f32.mrb[0].mxu0
  %275 = vmatprep.mubr.f32.mxu0 0.0
  %276 = vmatmul.mubr.f32.gmra.mrb[0].mxu0 %v196
  %v277 = vpop.f32.mrb[0].mxu0
  %v278 = vadd.f32 %v181, %v277
  %v279 = vpop.f32.mrb[0].mxu0
  %280 = vmatprep.mubr.f32.mxu0 0.0
  %281 = vmatmul.mubr.f32.gmra.mrb[0].mxu0 %v199
  %v282 = vpop.f32.mrb[0].mxu0
  %v283 = vadd.f32 %v186, %v282
  %v284 = vpop.f32.mrb[0].mxu0
  %285 = vdwg.mxu0
  %v286 = vtanh.pop %v268
  %v287 = vtanh.pop %v273
  %v288 = vtanh.pop %v278
  %v289 = vtanh.pop %v283
  %v290 = vld [vmem:[%s5] sm:$0xff]
  %v291 = vld [vmem:[%s6] sm:$0xff]
  %293 = vset.pattern.permute.xlu0 0
  %294 = vperm.xlu0 %293, %v291
  %v295 = vpop.permute.xlu0 %294
  %v298 = vsel %vm188, %v290, 0
  %300 = vmatprep.subr.mxu0 0.0
  %301 = vmatpush1.msra.mxu0 %v286
  %302 = vmatprep.subr.mxu0 0.0
  %303 = vmatpush1.msra.mxu0 %v287
  %304 = vmatprep.subr.mxu0 0.0
  %305 = vmatpush1.msra.mxu0 %v288
  %306 = vmatprep.subr.mxu0 0.0
  %307 = vmatpush1.msra.mxu0 %v289
  %308 = vmatprep.subr.mxu0 0.0
  %309 = vmatpush1.msra.mxu0 0.0
  %310 = vmatprep.subr.mxu0 0.0
  %311 = vmatpush1.msra.mxu0 0.0
  %312 = vmatprep.subr.mxu0 0.0
  %313 = vmatpush1.msra.mxu0 0.0
  %314 = vmatprep.subr.mxu0 0.0
  %315 = vmatpush1.msra.mxu0 0.0
  %316 = vmatprep.subr.mxu0 0.0
  %317 = vmatpush1.msra.mxu0 0.0
  %318 = vmatprep.subr.mxu0 0.0
  %319 = vmatpush1.msra.mxu0 0.0
  %320 = vmatprep.subr.mxu0 0.0
  %321 = vmatpush1.msra.mxu0 0.0
  %322 = vmatprep.subr.mxu0 0.0
  %323 = vmatpush1.msra.mxu0 0.0
  %324 = vmatprep.subr.mxu0 0.0
  %325 = vmatpush1.msra.mxu0 0.0
  %326 = vmatprep.subr.mxu0 0.0
  %327 = vmatpush1.msra.mxu0 0.0
  %328 = vmatprep.subr.mxu0 0.0
  %329 = vmatpush1.msra.mxu0 0.0
  %330 = vmatprep.subr.mxu0 0.0
  %331 = vmatpush1.msra.mxu0 0.0
  %332 = vmatprep.subr.mxu0 0.0
  %333 = vmatpush1.msra.mxu0 0.0
  %334 = vmatprep.subr.mxu0 0.0
  %335 = vmatpush1.msra.mxu0 0.0
  %336 = vmatprep.subr.mxu0 0.0
  %337 = vmatpush1.msra.mxu0 0.0
  %338 = vmatprep.subr.mxu0 0.0
  %339 = vmatpush1.msra.mxu0 0.0
  %340 = vmatprep.subr.mxu0 0.0
  %341 = vmatpush1.msra.mxu0 0.0
  %342 = vmatprep.subr.mxu0 0.0
  %343 = vmatpush1.msra.mxu0 0.0
  %344 = vmatprep.subr.mxu0 0.0
  %345 = vmatpush1.msra.mxu0 0.0
  %346 = vmatprep.subr.mxu0 0.0
  %347 = vmatpush1.msra.mxu0 0.0
  %348 = vmatprep.subr.mxu0 0.0
  %349 = vmatpush1.msra.mxu0 0.0
  %350 = vmatprep.subr.mxu0 0.0
  %351 = vmatpush1.msra.mxu0 0.0
  %352 = vmatprep.subr.mxu0 0.0
  %353 = vmatpush1.msra.mxu0 0.0
  %354 = vmatprep.subr.mxu0 0.0
  %355 = vmatpush1.msra.mxu0 0.0
  %356 = vmatprep.subr.mxu0 0.0
  %357 = vmatpush1.msra.mxu0 0.0
  %358 = vmatprep.subr.mxu0 0.0
  %359 = vmatpush1.msra.mxu0 0.0
  %360 = vmatprep.subr.mxu0 0.0
  %361 = vmatpush1.msra.mxu0 0.0
  %362 = vmatprep.subr.mxu0 0.0
  %363 = vmatpush1.msra.mxu0 0.0
  %364 = vmatprep.mubr.f32.mxu0 0.0
  %365 = vmatmul.mubr.f32.gmra.mrb[0].mxu0 %v298
  %v366 = vpop.f32.mrb[0].mxu0
  %v367 = vadd.f32 %v295, %v366
  %v368 = vpop.f32.mrb[0].mxu0
  %369 = vdwg.mxu0
  %v370 = vmax.f32 %v367, 0.0
  %vm371 = vcmp.ne.f32.partialorder %v367, %v367
  %v372 = vadd.f32 %v367, 0.0
  %v373 = vand.u32 2147483647, %v367
  %v374 = vsub.f32 0.0, %v373
  %v375 = vmul.f32 %v374, 1.442695
  %v376 = vpow.pop %v375
  %v377 = vadd.f32 %v376, 1.0
  %v378 = vlog2.pop %v377
  %v379 = vmul.f32 %v378, 0.6931472
  %v380 = vmul.f32 -0.5, %v376
  %v381 = vadd.f32 %v380, 1.0
  %v382 = vmul.f32 %v381, %v376
  %v383 = vand.u32 2147483647, %v376
  %vm384 = vcmp.lt.f32.partialorder %v383, 0.0004427343
  %v385 = vsel %vm384, %v382, %v379
  %v386 = vadd.f32 %v370, %v385
  %v387 = vsel %vm371, %v372, %v386
  %v388 = vadd.f32 %v387, 1.0
  %vm389 = vcmask 64512
  %390 = vst.msk [vmem:[%s7] sm:$0xff] %vm389, %v388
  // Predicated region
  $region30: #{actor_beta_forward.1} parent=0 // pred_check
    _
  $region31: #{actor_beta_forward.1} parent=0 // pred_check_branch
    %392 = sbr.rel (0) target = $region33
  $region32: #{actor_beta_forward.1} parent=0 // pred_region
    _
  $region33: #{actor_beta_forward.1} parent=0 // pred_fallthru
    _
  // Predicated region
  $region34: #{actor_beta_forward.1} parent=0 // pred_check
    _
  $region35: #{actor_beta_forward.1} parent=0 // pred_check_branch
    %394 = sbr.rel (0) target = $region37
  $region36: #{actor_beta_forward.1} parent=0 // pred_region
    _
  $region37: #{actor_beta_forward.1} parent=0 // pred_fallthru
    _

</llo_original>
